<compile_context>
chip_gen: v5e
topology: v5e:2x2
jax: 0.10.0
libtpu: 0.0.40
codegen_flags: <defaults>
</compile_context>

<pallas_src>
import functools

import jax
import jax.numpy as jnp
from jax.experimental import pallas as pl
from jax.experimental.pallas import tpu as pltpu


def _cie_kernel(codes_ref, fused_ref, b1_ref, w2_ref, b2_ref, w3_ref, b3_ref,
                wl_ref, bl_ref, o_ref, *, compute_dtype):
    tm, n_codes = codes_ref.shape
    vocab_p = fused_ref.shape[0]

    # --- fused embedding-gather + mean + first Conv1d(k=1): counts @ ((E@W1)/C) ---
    codes = codes_ref[...]                                          # (TM, C) int32
    voc_ids = jax.lax.broadcasted_iota(jnp.int32, (tm, vocab_p), 1)
    counts = jnp.zeros((tm, vocab_p), compute_dtype)
    for j in range(n_codes):                                        # static, small C
        counts += (codes[:, j:j + 1] == voc_ids).astype(compute_dtype)
    # counts are small exact integers; 1/C is already folded into fused_ref (f32-side).
    h = jnp.tanh((jnp.dot(counts.astype(fused_ref.dtype), fused_ref[...],
                          preferred_element_type=jnp.float32)
                  + b1_ref[...]).astype(compute_dtype))

    # --- remaining "CNN": two kernel_size=1 Conv1d + Tanh (MaxPool1d(1) == identity) ---
    def layer(x, w_ref, b_ref):
        acc = jnp.dot(x.astype(w_ref.dtype), w_ref[...],
                      preferred_element_type=jnp.float32) + b_ref[...]
        return jnp.tanh(acc.astype(compute_dtype))

    h = layer(h, w2_ref, b2_ref)
    h = layer(h, w3_ref, b3_ref)

    # --- Linear(128 -> out) + Sigmoid ---
    y = jnp.dot(h.astype(wl_ref.dtype), wl_ref[...],
                preferred_element_type=jnp.float32) + bl_ref[...]
    o_ref[...] = jax.nn.sigmoid(y.astype(compute_dtype)).astype(o_ref.dtype)


def _round_up(x, m):
    return ((x + m - 1) // m) * m


def _pad2d(x, rows, cols):
    return jnp.pad(x, ((0, rows - x.shape[0]), (0, cols - x.shape[1])))


def _default_compute_dtype():
    """bf16 elementwise/transcendentals on v6e/v7x, f32 on v5e (no bf16 VPU/EUP)."""
    try:
        kind = jax.devices()[0].device_kind.lower()
    except Exception:  # pragma: no cover - defensive
        return jnp.float32
    if "v6" in kind or "v7" in kind:
        return jnp.bfloat16
    return jnp.float32


def clinical_information_extraction(codes, embedding, w1, b1, w2, b2, w3, b3,
                                    wl, bl, *, param_dtype=jnp.bfloat16,
                                    compute_dtype=None, out_dtype=jnp.float32,
                                    tile_m=1024):
    """codes: (V, C) int32 dense code indices per visit. Returns (V, out_dim)."""
    if compute_dtype is None:
        compute_dtype = _default_compute_dtype()

    V, C = codes.shape
    vocab, E = embedding.shape
    H = w1.shape[1]
    O = wl.shape[1]

    # Lane-dense padded sizes (128 lanes).
    VOCp = _round_up(vocab, 128)
    Hp = _round_up(H, 128)
    Op = _round_up(O, 128)

    # Visit tile: large to amortize per-grid-step overhead, but capped so there are
    # always >= 2 grid steps (megacore sharding on v7x) when V permits.
    TM = min(tile_m, max(8, _round_up(-(-V // 2), 8)))
    Vp = _round_up(V, TM)

    # Offline fold: (embedding @ W1) / C in f32, THEN pad + cast (keeps mean exact).
    fused_f32 = (embedding.astype(jnp.float32) @ w1.astype(jnp.float32)) * (1.0 / C)
    fused_p = _pad2d(fused_f32, VOCp, Hp).astype(param_dtype)
    w2_p = _pad2d(w2, Hp, Hp).astype(param_dtype)
    w3_p = _pad2d(w3, Hp, Hp).astype(param_dtype)
    wl_p = _pad2d(wl, Hp, Op).astype(param_dtype)
    b1_p = _pad2d(b1.reshape(1, -1), 1, Hp).astype(jnp.float32)
    b2_p = _pad2d(b2.reshape(1, -1), 1, Hp).astype(jnp.float32)
    b3_p = _pad2d(b3.reshape(1, -1), 1, Hp).astype(jnp.float32)
    bl_p = _pad2d(bl.reshape(1, -1), 1, Op).astype(jnp.float32)
    codes_p = jnp.pad(codes, ((0, Vp - V), (0, 0)))          # pad rows -> sliced off

    rep = lambda i: (0, 0)       # parameters: same full block at every grid step
    grid = (Vp // TM,)

    kernel = functools.partial(_cie_kernel, compute_dtype=compute_dtype)

    out = pl.pallas_call(
        kernel,
        out_shape=jax.ShapeDtypeStruct((Vp, Op), out_dtype),
        grid=grid,
        in_specs=[
            pl.BlockSpec((TM, C), lambda i: (i, 0)),      # codes (tiled over V)
            pl.BlockSpec((VOCp, Hp), rep),                # fused (E@W1)/C table
            pl.BlockSpec((1, Hp), rep),                   # b1
            pl.BlockSpec((Hp, Hp), rep),                  # w2
            pl.BlockSpec((1, Hp), rep),                   # b2
            pl.BlockSpec((Hp, Hp), rep),                  # w3
            pl.BlockSpec((1, Hp), rep),                   # b3
            pl.BlockSpec((Hp, Op), rep),                  # wl
            pl.BlockSpec((1, Op), rep),                   # bl
        ],
        out_specs=pl.BlockSpec((TM, Op), lambda i: (i, 0)),
        compiler_params=pltpu.CompilerParams(
            dimension_semantics=("parallel",),            # megacore sharding on v7x
            vmem_limit_bytes=32 * 1024 * 1024,            # fits v5e/v6e/v7x
        ),
    )(codes_p, fused_p, b1_p, w2_p, b2_p, w3_p, b3_p, wl_p, bl_p)

    return out[:V, :O]


def _ref_forward(codes, embedding, w1, b1, w2, b2, w3, b3, wl, bl):
    """Pure-JAX f32 reference mirroring the PyTorch forward."""
    emb_mean = embedding[codes].mean(axis=1)               # (V, E)
    h = jnp.tanh(emb_mean @ w1 + b1)
    h = jnp.tanh(h @ w2 + b2)
    h = jnp.tanh(h @ w3 + b3)
    return jax.nn.sigmoid(h @ wl + bl)                     # (V, out_dim)


if __name__ == "__main__":
    # Small, module-consistent shapes.
    num_embeddings = 50      # vocab size
    embedding_dim = 100      # E
    hidden = 128             # CNN channels
    out_dim = 100            # linear output
    V, C = 8, 4              # visits, codes per visit

    key = jax.random.PRNGKey(0)
    keys = jax.random.split(key, 10)

    # Deterministic parameter init (Conv1d weights (out,in,1) stored transposed
    # as (in,out) matmul matrices, matching the module's shapes).
    embedding = jax.random.normal(keys[0], (num_embeddings, embedding_dim),
                                  jnp.float32)

    def uinit(k, shape, fan_in):
        bound = 1.0 / jnp.sqrt(fan_in)
        return jax.random.uniform(k, shape, jnp.float32, -bound, bound)

    w1 = uinit(keys[1], (embedding_dim, hidden), embedding_dim)
    b1 = uinit(keys[2], (1, hidden), embedding_dim)
    w2 = uinit(keys[3], (hidden, hidden), hidden)
    b2 = uinit(keys[4], (1, hidden), hidden)
    w3 = uinit(keys[5], (hidden, hidden), hidden)
    b3 = uinit(keys[6], (1, hidden), hidden)
    wl = uinit(keys[7], (hidden, out_dim), hidden)
    bl = uinit(keys[8], (1, out_dim), hidden)

    codes = jax.random.randint(keys[9], (V, C), 0, num_embeddings, jnp.int32)

    out = clinical_information_extraction(codes, embedding, w1, b1, w2, b2,
                                          w3, b3, wl, bl)
    out = jax.block_until_ready(out)

    ref = _ref_forward(codes, embedding, w1, b1, w2, b2, w3, b3, wl, bl)
    assert out.shape == (V, out_dim)
    # bf16 weights (and bf16 transcendentals on v6e/v7x) vs f32 reference.
    max_err = float(jnp.max(jnp.abs(out - ref)))
    assert jnp.allclose(out, ref, atol=2e-2), max_err

    print("KERNEL_OK")
</pallas_src>

<mosaic_0001>
module attributes {stable_mosaic.version = 11 : i64} {
  func.func @_cie_kernel(%arg0: i32, %arg1: memref<8x4xi32, #tpu.memory_space<vmem>>, %arg2: memref<128x128xbf16, #tpu.memory_space<vmem>>, %arg3: memref<1x128xf32, #tpu.memory_space<vmem>>, %arg4: memref<128x128xbf16, #tpu.memory_space<vmem>>, %arg5: memref<1x128xf32, #tpu.memory_space<vmem>>, %arg6: memref<128x128xbf16, #tpu.memory_space<vmem>>, %arg7: memref<1x128xf32, #tpu.memory_space<vmem>>, %arg8: memref<128x128xbf16, #tpu.memory_space<vmem>>, %arg9: memref<1x128xf32, #tpu.memory_space<vmem>>, %arg10: memref<8x128xf32, #tpu.memory_space<vmem>>) attributes {dimension_semantics = [#tpu.dimension_semantics<parallel>], iteration_bounds = array<i64: 1>, scalar_prefetch = 0 : i64, scratch_operands = 0 : i64, tpu.core_type = #tpu.core_type<tc>, window_params = [{transform_indices = @transform_0, window_bounds = array<i64: 8, 4>}, {pipeline_mode = #tpu.pipeline_mode<synchronous>, transform_indices = @transform_1, window_bounds = array<i64: 128, 128>}, {pipeline_mode = #tpu.pipeline_mode<synchronous>, transform_indices = @transform_2, window_bounds = array<i64: 1, 128>}, {pipeline_mode = #tpu.pipeline_mode<synchronous>, transform_indices = @transform_3, window_bounds = array<i64: 128, 128>}, {pipeline_mode = #tpu.pipeline_mode<synchronous>, transform_indices = @transform_4, window_bounds = array<i64: 1, 128>}, {pipeline_mode = #tpu.pipeline_mode<synchronous>, transform_indices = @transform_5, window_bounds = array<i64: 128, 128>}, {pipeline_mode = #tpu.pipeline_mode<synchronous>, transform_indices = @transform_6, window_bounds = array<i64: 1, 128>}, {pipeline_mode = #tpu.pipeline_mode<synchronous>, transform_indices = @transform_7, window_bounds = array<i64: 128, 128>}, {pipeline_mode = #tpu.pipeline_mode<synchronous>, transform_indices = @transform_8, window_bounds = array<i64: 1, 128>}, {transform_indices = @transform_9, window_bounds = array<i64: 8, 128>}]} {
    %c0 = arith.constant 0 : index
    %c0_0 = arith.constant 0 : index
    %0 = vector.load %arg1[%c0, %c0_0] : memref<8x4xi32, #tpu.memory_space<vmem>>, vector<8x4xi32>
    %1 = tpu.iota {dimensions = array<i32: 1>} : vector<8x128xi32>
    %cst = arith.constant 0.000000e+00 : f32
    %2 = vector.broadcast %cst : f32 to vector<8x128xf32>
    %3 = vector.extract_strided_slice %0 {offsets = [0, 0], sizes = [8, 1], strides = [1, 1]} : vector<8x4xi32> to vector<8x1xi32>
    %4 = vector.broadcast %3 : vector<8x1xi32> to vector<8x128xi32>
    %5 = arith.cmpi eq, %4, %1 : vector<8x128xi32>
    %6 = arith.extui %5 : vector<8x128xi1> to vector<8x128xi32>
    %7 = arith.sitofp %6 : vector<8x128xi32> to vector<8x128xf32>
    %8 = arith.addf %2, %7 : vector<8x128xf32>
    %9 = vector.extract_strided_slice %0 {offsets = [0, 1], sizes = [8, 1], strides = [1, 1]} : vector<8x4xi32> to vector<8x1xi32>
    %10 = vector.broadcast %9 : vector<8x1xi32> to vector<8x128xi32>
    %11 = arith.cmpi eq, %10, %1 : vector<8x128xi32>
    %12 = arith.extui %11 : vector<8x128xi1> to vector<8x128xi32>
    %13 = arith.sitofp %12 : vector<8x128xi32> to vector<8x128xf32>
    %14 = arith.addf %8, %13 : vector<8x128xf32>
    %15 = vector.extract_strided_slice %0 {offsets = [0, 2], sizes = [8, 1], strides = [1, 1]} : vector<8x4xi32> to vector<8x1xi32>
    %16 = vector.broadcast %15 : vector<8x1xi32> to vector<8x128xi32>
    %17 = arith.cmpi eq, %16, %1 : vector<8x128xi32>
    %18 = arith.extui %17 : vector<8x128xi1> to vector<8x128xi32>
    %19 = arith.sitofp %18 : vector<8x128xi32> to vector<8x128xf32>
    %20 = arith.addf %14, %19 : vector<8x128xf32>
    %21 = vector.extract_strided_slice %0 {offsets = [0, 3], sizes = [8, 1], strides = [1, 1]} : vector<8x4xi32> to vector<8x1xi32>
    %22 = vector.broadcast %21 : vector<8x1xi32> to vector<8x128xi32>
    %23 = arith.cmpi eq, %22, %1 : vector<8x128xi32>
    %24 = arith.extui %23 : vector<8x128xi1> to vector<8x128xi32>
    %25 = arith.sitofp %24 : vector<8x128xi32> to vector<8x128xf32>
    %26 = arith.addf %20, %25 : vector<8x128xf32>
    %27 = arith.truncf %26 : vector<8x128xf32> to vector<8x128xbf16>
    %c0_1 = arith.constant 0 : index
    %c0_2 = arith.constant 0 : index
    %28 = vector.load %arg2[%c0_1, %c0_2] : memref<128x128xbf16, #tpu.memory_space<vmem>>, vector<128x128xbf16>
    %cst_3 = arith.constant dense<0.000000e+00> : vector<8x128xf32>
    %29 = tpu.matmul %27, %28, %cst_3 {dimension_numbers = #tpu.dot_dimension_numbers<[1], [0], [0], [1], [0, 0, 1, 1], [], []>} : vector<8x128xbf16>, vector<128x128xbf16>, vector<8x128xf32> -> vector<8x128xf32>
    %c0_4 = arith.constant 0 : index
    %c0_5 = arith.constant 0 : index
    %30 = vector.load %arg3[%c0_4, %c0_5] : memref<1x128xf32, #tpu.memory_space<vmem>>, vector<1x128xf32>
    %31 = vector.broadcast %30 : vector<1x128xf32> to vector<8x128xf32>
    %32 = arith.addf %29, %31 : vector<8x128xf32>
    %33 = math.tanh %32 : vector<8x128xf32>
    %34 = arith.truncf %33 : vector<8x128xf32> to vector<8x128xbf16>
    %c0_6 = arith.constant 0 : index
    %c0_7 = arith.constant 0 : index
    %35 = vector.load %arg4[%c0_6, %c0_7] : memref<128x128xbf16, #tpu.memory_space<vmem>>, vector<128x128xbf16>
    %cst_8 = arith.constant dense<0.000000e+00> : vector<8x128xf32>
    %36 = tpu.matmul %34, %35, %cst_8 {dimension_numbers = #tpu.dot_dimension_numbers<[1], [0], [0], [1], [0, 0, 1, 1], [], []>} : vector<8x128xbf16>, vector<128x128xbf16>, vector<8x128xf32> -> vector<8x128xf32>
    %c0_9 = arith.constant 0 : index
    %c0_10 = arith.constant 0 : index
    %37 = vector.load %arg5[%c0_9, %c0_10] : memref<1x128xf32, #tpu.memory_space<vmem>>, vector<1x128xf32>
    %38 = vector.broadcast %37 : vector<1x128xf32> to vector<8x128xf32>
    %39 = arith.addf %36, %38 : vector<8x128xf32>
    %40 = math.tanh %39 : vector<8x128xf32>
    %41 = arith.truncf %40 : vector<8x128xf32> to vector<8x128xbf16>
    %c0_11 = arith.constant 0 : index
    %c0_12 = arith.constant 0 : index
    %42 = vector.load %arg6[%c0_11, %c0_12] : memref<128x128xbf16, #tpu.memory_space<vmem>>, vector<128x128xbf16>
    %cst_13 = arith.constant dense<0.000000e+00> : vector<8x128xf32>
    %43 = tpu.matmul %41, %42, %cst_13 {dimension_numbers = #tpu.dot_dimension_numbers<[1], [0], [0], [1], [0, 0, 1, 1], [], []>} : vector<8x128xbf16>, vector<128x128xbf16>, vector<8x128xf32> -> vector<8x128xf32>
    %c0_14 = arith.constant 0 : index
    %c0_15 = arith.constant 0 : index
    %44 = vector.load %arg7[%c0_14, %c0_15] : memref<1x128xf32, #tpu.memory_space<vmem>>, vector<1x128xf32>
    %45 = vector.broadcast %44 : vector<1x128xf32> to vector<8x128xf32>
    %46 = arith.addf %43, %45 : vector<8x128xf32>
    %47 = math.tanh %46 : vector<8x128xf32>
    %48 = arith.truncf %47 : vector<8x128xf32> to vector<8x128xbf16>
    %c0_16 = arith.constant 0 : index
    %c0_17 = arith.constant 0 : index
    %49 = vector.load %arg8[%c0_16, %c0_17] : memref<128x128xbf16, #tpu.memory_space<vmem>>, vector<128x128xbf16>
    %cst_18 = arith.constant dense<0.000000e+00> : vector<8x128xf32>
    %50 = tpu.matmul %48, %49, %cst_18 {dimension_numbers = #tpu.dot_dimension_numbers<[1], [0], [0], [1], [0, 0, 1, 1], [], []>} : vector<8x128xbf16>, vector<128x128xbf16>, vector<8x128xf32> -> vector<8x128xf32>
    %c0_19 = arith.constant 0 : index
    %c0_20 = arith.constant 0 : index
    %51 = vector.load %arg9[%c0_19, %c0_20] : memref<1x128xf32, #tpu.memory_space<vmem>>, vector<1x128xf32>
    %52 = vector.broadcast %51 : vector<1x128xf32> to vector<8x128xf32>
    %53 = arith.addf %50, %52 : vector<8x128xf32>
    %54 = arith.negf %53 : vector<8x128xf32>
    %55 = math.exp %54 : vector<8x128xf32>
    %cst_21 = arith.constant 1.000000e+00 : f32
    %56 = vector.broadcast %cst_21 : f32 to vector<8x128xf32>
    %57 = arith.addf %56, %55 : vector<8x128xf32>
    %58 = arith.divf %56, %57 : vector<8x128xf32>
    %c0_22 = arith.constant 0 : index
    %c0_23 = arith.constant 0 : index
    %59 = vector.load %arg10[%c0_22, %c0_23] : memref<8x128xf32, #tpu.memory_space<vmem>>, vector<8x128xf32>
    tpu.vector_store %arg10[%c0_22, %c0_23], %58 {strides = array<i32>} : memref<8x128xf32, #tpu.memory_space<vmem>>, vector<8x128xf32>,
    return
  }
  func.func @transform_0(%arg0: i32) -> (i32, i32) {
    %c0_i32 = arith.constant 0 : i32
    %c0_i32_0 = arith.constant 0 : i32
    return %arg0, %c0_i32 : i32, i32
  }
  func.func @transform_1(%arg0: i32) -> (i32, i32) {
    %c0_i32 = arith.constant 0 : i32
    %c0_i32_0 = arith.constant 0 : i32
    %c0_i32_1 = arith.constant 0 : i32
    return %c0_i32, %c0_i32_0 : i32, i32
  }
  func.func @transform_2(%arg0: i32) -> (i32, i32) {
    %c0_i32 = arith.constant 0 : i32
    %c0_i32_0 = arith.constant 0 : i32
    %c0_i32_1 = arith.constant 0 : i32
    return %c0_i32, %c0_i32_0 : i32, i32
  }
  func.func @transform_3(%arg0: i32) -> (i32, i32) {
    %c0_i32 = arith.constant 0 : i32
    %c0_i32_0 = arith.constant 0 : i32
    %c0_i32_1 = arith.constant 0 : i32
    return %c0_i32, %c0_i32_0 : i32, i32
  }
  func.func @transform_4(%arg0: i32) -> (i32, i32) {
    %c0_i32 = arith.constant 0 : i32
    %c0_i32_0 = arith.constant 0 : i32
    %c0_i32_1 = arith.constant 0 : i32
    return %c0_i32, %c0_i32_0 : i32, i32
  }
  func.func @transform_5(%arg0: i32) -> (i32, i32) {
    %c0_i32 = arith.constant 0 : i32
    %c0_i32_0 = arith.constant 0 : i32
    %c0_i32_1 = arith.constant 0 : i32
    return %c0_i32, %c0_i32_0 : i32, i32
  }
  func.func @transform_6(%arg0: i32) -> (i32, i32) {
    %c0_i32 = arith.constant 0 : i32
    %c0_i32_0 = arith.constant 0 : i32
    %c0_i32_1 = arith.constant 0 : i32
    return %c0_i32, %c0_i32_0 : i32, i32
  }
  func.func @transform_7(%arg0: i32) -> (i32, i32) {
    %c0_i32 = arith.constant 0 : i32
    %c0_i32_0 = arith.constant 0 : i32
    %c0_i32_1 = arith.constant 0 : i32
    return %c0_i32, %c0_i32_0 : i32, i32
  }
  func.func @transform_8(%arg0: i32) -> (i32, i32) {
    %c0_i32 = arith.constant 0 : i32
    %c0_i32_0 = arith.constant 0 : i32
    %c0_i32_1 = arith.constant 0 : i32
    return %c0_i32, %c0_i32_0 : i32, i32
  }
  func.func @transform_9(%arg0: i32) -> (i32, i32) {
    %c0_i32 = arith.constant 0 : i32
    %c0_i32_0 = arith.constant 0 : i32
    return %arg0, %c0_i32 : i32, i32
  }
}

</mosaic_0001>

<llo_original>
// kernel: tpu_custom_call.1
$region0: #{tpu_custom_call.1}
  #allocation0 [shape = 'u32[]', space=smem, size = 0x4, offset = 0x4, fixed_abs, tag = 'smem constant byte address 0x4 - core index']
  #allocation1 [shape = 'u32[72,128]{1,0:T(1,128)}', space=vmem, size = 0x9000, scoped, tag = 'internal scratch']
  %s0 = inlined_call_operand.vmem [shape: s32[8,4], index: 0, kind: input, shape index: {}]
  %s1 = inlined_call_operand.hbm [shape: bf16[128,128], index: 1, kind: input, shape index: {}]
  %s2 = inlined_call_operand.vmem [shape: f32[1,128], index: 2, kind: input, shape index: {}]
  %s3 = inlined_call_operand.hbm [shape: bf16[128,128], index: 3, kind: input, shape index: {}]
  %s4 = inlined_call_operand.vmem [shape: f32[1,128], index: 4, kind: input, shape index: {}]
  %s5 = inlined_call_operand.hbm [shape: bf16[128,128], index: 5, kind: input, shape index: {}]
  %s6 = inlined_call_operand.vmem [shape: f32[1,128], index: 6, kind: input, shape index: {}]
  %s7 = inlined_call_operand.hbm [shape: bf16[128,128], index: 7, kind: input, shape index: {}]
  %s8 = inlined_call_operand.vmem [shape: f32[1,128], index: 8, kind: input, shape index: {}]
  %s9 = inlined_call_operand.hbm [shape: f32[8,128], index: 9, kind: output, shape index: {}]
  %s10 = sld [smem:[#allocation0]]
  $region62: #{tpu_custom_call.1} parent=0
    _
  %s12 = ssub.s32 1, %s10
  %s13 = scalar_select 0, %s12, %s10
  $region1: #{tpu_custom_call.1} parent=0
    #allocation2 [shape = 'u8[32768]{0}', space=vmem, size = 0x8000, scoped, tag = 'input window, operand 1, single buffered']
    #allocation3 [shape = 's32[1]{0}', space=sflag, size = 0x4, scoped, tag = 'scoped memory for tpu_custom_call.1']
    #allocation4 [shape = 's32[1]{0}', space=sflag, size = 0x4, scoped, tag = 'scoped memory for tpu_custom_call.1']
    #allocation5 [shape = 'u8[32768]{0}', space=vmem, size = 0x8000, scoped, tag = 'input window, operand 3, single buffered']
    #allocation6 [shape = 's32[1]{0}', space=sflag, size = 0x4, scoped, tag = 'scoped memory for tpu_custom_call.1']
    #allocation7 [shape = 'u8[32768]{0}', space=vmem, size = 0x8000, scoped, tag = 'input window, operand 5, single buffered']
    #allocation8 [shape = 'u8[32768]{0}', space=vmem, size = 0x8000, scoped, tag = 'input window, operand 7, single buffered']
    #allocation9 [shape = 's32[1]{0}', space=sflag, size = 0x4, scoped, tag = 'scoped memory for tpu_custom_call.1']
    #allocation10 [shape = 'u8[4096]{0}', space=vmem, size = 0x1000, scoped, tag = 'output window, operand 0, single buffered']
    %14 = vsyncpa [#allocation3], 0
    %15 = vsyncpa [#allocation6], 0
    %16 = vsyncpa [#allocation9], 0
    %17 = vsyncpa [#allocation4], 0
    // Predicated region
    $region2: #{tpu_custom_call.1} parent=1 // pred_check
      _
    $region3: #{tpu_custom_call.1} parent=1 // pred_check_branch
      %19 = sbr.rel (0) target = $region5
    $region4: #{tpu_custom_call.1} parent=1 // pred_region
      _
    $region5: #{tpu_custom_call.1} parent=1 // pred_fallthru
      _
    // Predicated region
    $region6: #{tpu_custom_call.1} parent=1 // pred_check
      _
    $region7: #{tpu_custom_call.1} parent=1 // pred_check_branch
      %21 = sbr.rel (0) target = $region9
    $region8: #{tpu_custom_call.1} parent=1 // pred_region
      %23 = vsyncadd [#allocation3], 0
      %s24 = sshll.u32 %s1, 4
      %s25 = int_to_ptr.hbm [resolvable:$true] %s24
      %s26 = sshll.u32 [#allocation2], 4
      %s27 = int_to_ptr.vmem [resolvable:$true] %s26
      %32 = dma.hbm_to_vmem [thread:$0]  %s25, 1024, %s27, [#allocation3], 64, 64, 4
    $region9: #{tpu_custom_call.1} parent=1 // pred_fallthru
      _
    // Predicated region
    $region10: #{tpu_custom_call.1} parent=1 // pred_check
      _
    $region11: #{tpu_custom_call.1} parent=1 // pred_check_branch
      %34 = sbr.rel (0) target = $region13
    $region12: #{tpu_custom_call.1} parent=1 // pred_region
      _
    $region13: #{tpu_custom_call.1} parent=1 // pred_fallthru
      _
    // Predicated region
    $region14: #{tpu_custom_call.1} parent=1 // pred_check
      _
    $region15: #{tpu_custom_call.1} parent=1 // pred_check_branch
      %36 = sbr.rel (0) target = $region17
    $region16: #{tpu_custom_call.1} parent=1 // pred_region
      %38 = vsyncadd [#allocation6], 0
      %s39 = sshll.u32 %s3, 4
      %s40 = int_to_ptr.hbm [resolvable:$true] %s39
      %s41 = sshll.u32 [#allocation5], 4
      %s42 = int_to_ptr.vmem [resolvable:$true] %s41
      %47 = dma.hbm_to_vmem [thread:$0]  %s40, 1024, %s42, [#allocation6], 64, 64, 4
    $region17: #{tpu_custom_call.1} parent=1 // pred_fallthru
      _
    // Predicated region
    $region18: #{tpu_custom_call.1} parent=1 // pred_check
      _
    $region19: #{tpu_custom_call.1} parent=1 // pred_check_branch
      %49 = sbr.rel (0) target = $region21
    $region20: #{tpu_custom_call.1} parent=1 // pred_region
      _
    $region21: #{tpu_custom_call.1} parent=1 // pred_fallthru
      _
    // Predicated region
    $region22: #{tpu_custom_call.1} parent=1 // pred_check
      _
    $region23: #{tpu_custom_call.1} parent=1 // pred_check_branch
      %51 = sbr.rel (0) target = $region25
    $region24: #{tpu_custom_call.1} parent=1 // pred_region
      %53 = vsyncadd [#allocation6], 0
      %s54 = sshll.u32 %s5, 4
      %s55 = int_to_ptr.hbm [resolvable:$true] %s54
      %s56 = sshll.u32 [#allocation7], 4
      %s57 = int_to_ptr.vmem [resolvable:$true] %s56
      %62 = dma.hbm_to_vmem [thread:$0]  %s55, 1024, %s57, [#allocation6], 64, 64, 4
    $region25: #{tpu_custom_call.1} parent=1 // pred_fallthru
      _
    // Predicated region
    $region26: #{tpu_custom_call.1} parent=1 // pred_check
      _
    $region27: #{tpu_custom_call.1} parent=1 // pred_check_branch
      %64 = sbr.rel (0) target = $region29
    $region28: #{tpu_custom_call.1} parent=1 // pred_region
      _
    $region29: #{tpu_custom_call.1} parent=1 // pred_fallthru
      _
    // Predicated region
    $region30: #{tpu_custom_call.1} parent=1 // pred_check
      _
    $region31: #{tpu_custom_call.1} parent=1 // pred_check_branch
      %66 = sbr.rel (0) target = $region33
    $region32: #{tpu_custom_call.1} parent=1 // pred_region
      %68 = vsyncadd [#allocation9], 0
      %s69 = sshll.u32 %s7, 4
      %s70 = int_to_ptr.hbm [resolvable:$true] %s69
      %s71 = sshll.u32 [#allocation8], 4
      %s72 = int_to_ptr.vmem [resolvable:$true] %s71
      %77 = dma.hbm_to_vmem [thread:$0]  %s70, 1024, %s72, [#allocation9], 64, 64, 4
    $region33: #{tpu_custom_call.1} parent=1 // pred_fallthru
      _
    // Predicated region
    $region34: #{tpu_custom_call.1} parent=1 // pred_check
      _
    $region35: #{tpu_custom_call.1} parent=1 // pred_check_branch
      %79 = sbr.rel (0) target = $region37
    $region36: #{tpu_custom_call.1} parent=1 // pred_region
      _
    $region37: #{tpu_custom_call.1} parent=1 // pred_fallthru
      _
    // Predicated region
    $region38: #{tpu_custom_call.1} parent=1 // pred_check
      _
    $region39: #{tpu_custom_call.1} parent=1 // pred_check_branch
      %81 = sbr.rel (0) target = $region41
    $region40: #{tpu_custom_call.1} parent=1 // pred_region
      %83 = dma.done [#allocation3], 1024
    $region41: #{tpu_custom_call.1} parent=1 // pred_fallthru
      _
    // Predicated region
    $region42: #{tpu_custom_call.1} parent=1 // pred_check
      _
    $region43: #{tpu_custom_call.1} parent=1 // pred_check_branch
      %85 = sbr.rel (0) target = $region45
    $region44: #{tpu_custom_call.1} parent=1 // pred_region
      %87 = dma.done [#allocation6], 1024
    $region45: #{tpu_custom_call.1} parent=1 // pred_fallthru
      _
    // Predicated region
    $region46: #{tpu_custom_call.1} parent=1 // pred_check
      _
    $region47: #{tpu_custom_call.1} parent=1 // pred_check_branch
      %89 = sbr.rel (0) target = $region49
    $region48: #{tpu_custom_call.1} parent=1 // pred_region
      %91 = dma.done [#allocation6], 1024
    $region49: #{tpu_custom_call.1} parent=1 // pred_fallthru
      _
    // Predicated region
    $region50: #{tpu_custom_call.1} parent=1 // pred_check
      _
    $region51: #{tpu_custom_call.1} parent=1 // pred_check_branch
      %93 = sbr.rel (0) target = $region53
    $region52: #{tpu_custom_call.1} parent=1 // pred_region
      %95 = dma.done [#allocation9], 1024
    $region53: #{tpu_custom_call.1} parent=1 // pred_fallthru
      _
    %v96 = vld [vmem:[%s0] sm:$0xff]
    %v97 = vlaneseq
    %v98 = vand.u32 %v97, 127
    %99 = vset.pattern.permute.xlu0 0
    %100 = vperm.xlu0 %99, %v96
    %v101 = vpop.permute.xlu0 %100
    %vm102 = vcmp.eq.s32.totalorder %v101, %v98
    %v103 = vsel %vm102, 1, 0
    %v104 = vcvt.s32.f32 %v103
    %v105 = vadd.f32 %v104, 0.0
    %106 = vset.pattern.permute.xlu0 1
    %107 = vperm.xlu0 %106, %v96
    %v108 = vpop.permute.xlu0 %107
    %vm109 = vcmp.eq.s32.totalorder %v108, %v98
    %v110 = vsel %vm109, 1, 0
    %v111 = vcvt.s32.f32 %v110
    %v112 = vadd.f32 %v105, %v111
    %113 = vset.pattern.permute.xlu0 2
    %114 = vperm.xlu0 %113, %v96
    %v115 = vpop.permute.xlu0 %114
    %vm116 = vcmp.eq.s32.totalorder %v115, %v98
    %v117 = vsel %vm116, 1, 0
    %v118 = vcvt.s32.f32 %v117
    %v119 = vadd.f32 %v112, %v118
    %120 = vset.pattern.permute.xlu0 3
    %121 = vperm.xlu0 %120, %v96
    %v122 = vpop.permute.xlu0 %121
    %vm123 = vcmp.eq.s32.totalorder %v122, %v98
    %v124 = vsel %vm123, 1, 0
    %v125 = vcvt.s32.f32 %v124
    %v126 = vadd.f32 %v119, %v125
    %v127 = vpack.c.bf16 %v126, %v126
    %v128 = vld [vmem:[#allocation2] sm:$0xf]
    %v129 = vld [vmem:[#allocation2 + $0x4] sm:$0xf]
    %v130 = vld [vmem:[#allocation2 + $0x8] sm:$0xf]
    %v131 = vld [vmem:[#allocation2 + $0xc] sm:$0xf]
    %v132 = vld [vmem:[#allocation2 + $0x10] sm:$0xf]
    %v133 = vld [vmem:[#allocation2 + $0x14] sm:$0xf]
    %v134 = vld [vmem:[#allocation2 + $0x18] sm:$0xf]
    %v135 = vld [vmem:[#allocation2 + $0x1c] sm:$0xf]
    %v136 = vld [vmem:[#allocation2 + $0x20] sm:$0xf]
    %v137 = vld [vmem:[#allocation2 + $0x24] sm:$0xf]
    %v138 = vld [vmem:[#allocation2 + $0x28] sm:$0xf]
    %v139 = vld [vmem:[#allocation2 + $0x2c] sm:$0xf]
    %v140 = vld [vmem:[#allocation2 + $0x30] sm:$0xf]
    %v141 = vld [vmem:[#allocation2 + $0x34] sm:$0xf]
    %v142 = vld [vmem:[#allocation2 + $0x38] sm:$0xf]
    %v143 = vld [vmem:[#allocation2 + $0x3c] sm:$0xf]
    %v144 = vld [vmem:[%s2] sm:$0x1]
    %v146 = vperm.slane %v144, 0
    %v164 = vunpack.c.l.b16 %v128
    %v165 = vunpack.c.l.b16 %v129
    %v166 = vunpack.c.l.b16 %v130
    %v167 = vunpack.c.l.b16 %v131
    %v168 = vunpack.c.l.b16 %v132
    %v169 = vunpack.c.l.b16 %v133
    %v170 = vunpack.c.l.b16 %v134
    %v171 = vunpack.c.l.b16 %v135
    %v172 = vunpack.c.l.b16 %v136
    %v173 = vunpack.c.l.b16 %v137
    %v174 = vunpack.c.l.b16 %v138
    %v175 = vunpack.c.l.b16 %v139
    %v176 = vunpack.c.l.b16 %v140
    %v177 = vunpack.c.l.b16 %v141
    %v178 = vunpack.c.l.b16 %v142
    %v179 = vunpack.c.l.b16 %v143
    %v180 = vpack.c.b16 %v165, %v164
    %v181 = vpack.c.b16 %v167, %v166
    %v182 = vpack.c.b16 %v169, %v168
    %v183 = vpack.c.b16 %v171, %v170
    %v184 = vpack.c.b16 %v173, %v172
    %v185 = vpack.c.b16 %v175, %v174
    %v186 = vpack.c.b16 %v177, %v176
    %v187 = vpack.c.b16 %v179, %v178
    %196 = vmatpush.bf16.msra.mxu0 %v187
    %197 = vmatpush.bf16.msra.mxu0 %v186
    %198 = vmatpush.bf16.msra.mxu0 %v185
    %199 = vmatpush.bf16.msra.mxu0 %v184
    %200 = vmatpush.bf16.msra.mxu0 %v183
    %201 = vmatpush.bf16.msra.mxu0 %v182
    %202 = vmatpush.bf16.msra.mxu0 %v181
    %203 = vmatpush.bf16.msra.mxu0 %v180
    %204 = vmatmul.bf16.gmra.mxu0 %v127
    %v205 = vpop.f32.mrf.mxu0
    %v206 = vadd.f32 %v146, %v205
    %v207 = vpop.f32.mrf.mxu0
    %208 = vdwg.mxu0
    %v209 = vtanh.pop %v206
    %v210 = vpack.c.bf16 %v209, %v209
    %v211 = vld [vmem:[#allocation5] sm:$0xf]
    %v212 = vld [vmem:[#allocation5 + $0x4] sm:$0xf]
    %v213 = vld [vmem:[#allocation5 + $0x8] sm:$0xf]
    %v214 = vld [vmem:[#allocation5 + $0xc] sm:$0xf]
    %v215 = vld [vmem:[#allocation5 + $0x10] sm:$0xf]
    %v216 = vld [vmem:[#allocation5 + $0x14] sm:$0xf]
    %v217 = vld [vmem:[#allocation5 + $0x18] sm:$0xf]
    %v218 = vld [vmem:[#allocation5 + $0x1c] sm:$0xf]
    %v219 = vld [vmem:[#allocation5 + $0x20] sm:$0xf]
    %v220 = vld [vmem:[#allocation5 + $0x24] sm:$0xf]
    %v221 = vld [vmem:[#allocation5 + $0x28] sm:$0xf]
    %v222 = vld [vmem:[#allocation5 + $0x2c] sm:$0xf]
    %v223 = vld [vmem:[#allocation5 + $0x30] sm:$0xf]
    %v224 = vld [vmem:[#allocation5 + $0x34] sm:$0xf]
    %v225 = vld [vmem:[#allocation5 + $0x38] sm:$0xf]
    %v226 = vld [vmem:[#allocation5 + $0x3c] sm:$0xf]
    %v227 = vld [vmem:[%s4] sm:$0x1]
    %v229 = vperm.slane %v227, 0
    %v247 = vunpack.c.l.b16 %v211
    %v248 = vunpack.c.l.b16 %v212
    %v249 = vunpack.c.l.b16 %v213
    %v250 = vunpack.c.l.b16 %v214
    %v251 = vunpack.c.l.b16 %v215
    %v252 = vunpack.c.l.b16 %v216
    %v253 = vunpack.c.l.b16 %v217
    %v254 = vunpack.c.l.b16 %v218
    %v255 = vunpack.c.l.b16 %v219
    %v256 = vunpack.c.l.b16 %v220
    %v257 = vunpack.c.l.b16 %v221
    %v258 = vunpack.c.l.b16 %v222
    %v259 = vunpack.c.l.b16 %v223
    %v260 = vunpack.c.l.b16 %v224
    %v261 = vunpack.c.l.b16 %v225
    %v262 = vunpack.c.l.b16 %v226
    %v263 = vpack.c.b16 %v248, %v247
    %v264 = vpack.c.b16 %v250, %v249
    %v265 = vpack.c.b16 %v252, %v251
    %v266 = vpack.c.b16 %v254, %v253
    %v267 = vpack.c.b16 %v256, %v255
    %v268 = vpack.c.b16 %v258, %v257
    %v269 = vpack.c.b16 %v260, %v259
    %v270 = vpack.c.b16 %v262, %v261
    %279 = vmatpush.bf16.msra.mxu0 %v270
    %280 = vmatpush.bf16.msra.mxu0 %v269
    %281 = vmatpush.bf16.msra.mxu0 %v268
    %282 = vmatpush.bf16.msra.mxu0 %v267
    %283 = vmatpush.bf16.msra.mxu0 %v266
    %284 = vmatpush.bf16.msra.mxu0 %v265
    %285 = vmatpush.bf16.msra.mxu0 %v264
    %286 = vmatpush.bf16.msra.mxu0 %v263
    %287 = vmatmul.bf16.gmra.mxu0 %v210
    %v288 = vpop.f32.mrf.mxu0
    %v289 = vadd.f32 %v229, %v288
    %v290 = vpop.f32.mrf.mxu0
    %291 = vdwg.mxu0
    %v292 = vtanh.pop %v289
    %v293 = vpack.c.bf16 %v292, %v292
    %v294 = vld [vmem:[#allocation7] sm:$0xf]
    %v295 = vld [vmem:[#allocation7 + $0x4] sm:$0xf]
    %v296 = vld [vmem:[#allocation7 + $0x8] sm:$0xf]
    %v297 = vld [vmem:[#allocation7 + $0xc] sm:$0xf]
    %v298 = vld [vmem:[#allocation7 + $0x10] sm:$0xf]
    %v299 = vld [vmem:[#allocation7 + $0x14] sm:$0xf]
    %v300 = vld [vmem:[#allocation7 + $0x18] sm:$0xf]
    %v301 = vld [vmem:[#allocation7 + $0x1c] sm:$0xf]
    %v302 = vld [vmem:[#allocation7 + $0x20] sm:$0xf]
    %v303 = vld [vmem:[#allocation7 + $0x24] sm:$0xf]
    %v304 = vld [vmem:[#allocation7 + $0x28] sm:$0xf]
    %v305 = vld [vmem:[#allocation7 + $0x2c] sm:$0xf]
    %v306 = vld [vmem:[#allocation7 + $0x30] sm:$0xf]
    %v307 = vld [vmem:[#allocation7 + $0x34] sm:$0xf]
    %v308 = vld [vmem:[#allocation7 + $0x38] sm:$0xf]
    %v309 = vld [vmem:[#allocation7 + $0x3c] sm:$0xf]
    %v310 = vld [vmem:[%s6] sm:$0x1]
    %v312 = vperm.slane %v310, 0
    %v330 = vunpack.c.l.b16 %v294
    %v331 = vunpack.c.l.b16 %v295
    %v332 = vunpack.c.l.b16 %v296
    %v333 = vunpack.c.l.b16 %v297
    %v334 = vunpack.c.l.b16 %v298
    %v335 = vunpack.c.l.b16 %v299
    %v336 = vunpack.c.l.b16 %v300
    %v337 = vunpack.c.l.b16 %v301
    %v338 = vunpack.c.l.b16 %v302
    %v339 = vunpack.c.l.b16 %v303
    %v340 = vunpack.c.l.b16 %v304
    %v341 = vunpack.c.l.b16 %v305
    %v342 = vunpack.c.l.b16 %v306
    %v343 = vunpack.c.l.b16 %v307
    %v344 = vunpack.c.l.b16 %v308
    %v345 = vunpack.c.l.b16 %v309
    %v346 = vpack.c.b16 %v331, %v330
    %v347 = vpack.c.b16 %v333, %v332
    %v348 = vpack.c.b16 %v335, %v334
    %v349 = vpack.c.b16 %v337, %v336
    %v350 = vpack.c.b16 %v339, %v338
    %v351 = vpack.c.b16 %v341, %v340
    %v352 = vpack.c.b16 %v343, %v342
    %v353 = vpack.c.b16 %v345, %v344
    %362 = vmatpush.bf16.msra.mxu0 %v353
    %363 = vmatpush.bf16.msra.mxu0 %v352
    %364 = vmatpush.bf16.msra.mxu0 %v351
    %365 = vmatpush.bf16.msra.mxu0 %v350
    %366 = vmatpush.bf16.msra.mxu0 %v349
    %367 = vmatpush.bf16.msra.mxu0 %v348
    %368 = vmatpush.bf16.msra.mxu0 %v347
    %369 = vmatpush.bf16.msra.mxu0 %v346
    %370 = vmatmul.bf16.gmra.mxu0 %v293
    %v371 = vpop.f32.mrf.mxu0
    %v372 = vadd.f32 %v312, %v371
    %v373 = vpop.f32.mrf.mxu0
    %374 = vdwg.mxu0
    %v375 = vtanh.pop %v372
    %v376 = vpack.c.bf16 %v375, %v375
    %v377 = vld [vmem:[#allocation8] sm:$0xf]
    %v378 = vld [vmem:[#allocation8 + $0x4] sm:$0xf]
    %v379 = vld [vmem:[#allocation8 + $0x8] sm:$0xf]
    %v380 = vld [vmem:[#allocation8 + $0xc] sm:$0xf]
    %v381 = vld [vmem:[#allocation8 + $0x10] sm:$0xf]
    %v382 = vld [vmem:[#allocation8 + $0x14] sm:$0xf]
    %v383 = vld [vmem:[#allocation8 + $0x18] sm:$0xf]
    %v384 = vld [vmem:[#allocation8 + $0x1c] sm:$0xf]
    %v385 = vld [vmem:[#allocation8 + $0x20] sm:$0xf]
    %v386 = vld [vmem:[#allocation8 + $0x24] sm:$0xf]
    %v387 = vld [vmem:[#allocation8 + $0x28] sm:$0xf]
    %v388 = vld [vmem:[#allocation8 + $0x2c] sm:$0xf]
    %v389 = vld [vmem:[#allocation8 + $0x30] sm:$0xf]
    %v390 = vld [vmem:[#allocation8 + $0x34] sm:$0xf]
    %v391 = vld [vmem:[#allocation8 + $0x38] sm:$0xf]
    %v392 = vld [vmem:[#allocation8 + $0x3c] sm:$0xf]
    %v393 = vld [vmem:[%s8] sm:$0x1]
    %v395 = vperm.slane %v393, 0
    %v413 = vunpack.c.l.b16 %v377
    %v414 = vunpack.c.l.b16 %v378
    %v415 = vunpack.c.l.b16 %v379
    %v416 = vunpack.c.l.b16 %v380
    %v417 = vunpack.c.l.b16 %v381
    %v418 = vunpack.c.l.b16 %v382
    %v419 = vunpack.c.l.b16 %v383
    %v420 = vunpack.c.l.b16 %v384
    %v421 = vunpack.c.l.b16 %v385
    %v422 = vunpack.c.l.b16 %v386
    %v423 = vunpack.c.l.b16 %v387
    %v424 = vunpack.c.l.b16 %v388
    %v425 = vunpack.c.l.b16 %v389
    %v426 = vunpack.c.l.b16 %v390
    %v427 = vunpack.c.l.b16 %v391
    %v428 = vunpack.c.l.b16 %v392
    %v429 = vpack.c.b16 %v414, %v413
    %v430 = vpack.c.b16 %v416, %v415
    %v431 = vpack.c.b16 %v418, %v417
    %v432 = vpack.c.b16 %v420, %v419
    %v433 = vpack.c.b16 %v422, %v421
    %v434 = vpack.c.b16 %v424, %v423
    %v435 = vpack.c.b16 %v426, %v425
    %v436 = vpack.c.b16 %v428, %v427
    %445 = vmatpush.bf16.msra.mxu0 %v436
    %446 = vmatpush.bf16.msra.mxu0 %v435
    %447 = vmatpush.bf16.msra.mxu0 %v434
    %448 = vmatpush.bf16.msra.mxu0 %v433
    %449 = vmatpush.bf16.msra.mxu0 %v432
    %450 = vmatpush.bf16.msra.mxu0 %v431
    %451 = vmatpush.bf16.msra.mxu0 %v430
    %452 = vmatpush.bf16.msra.mxu0 %v429
    %453 = vmatmul.bf16.gmra.mxu0 %v376
    %v454 = vpop.f32.mrf.mxu0
    %v455 = vadd.f32 %v395, %v454
    %v456 = vpop.f32.mrf.mxu0
    %457 = vdwg.mxu0
    %v458 = vxor.u32 %v455, 2147483648
    %v459 = vmul.f32 %v458, 1.442695
    %v460 = vpow.pop %v459
    %v461 = vadd.f32 %v460, 1.0
    %v462 = vrcp.pop %v461
    %v463 = vmul.f32 %v461, %v462
    %v464 = vsub.f32 1.0, %v463
    %v465 = vmul.f32 %v462, %v464
    %v466 = vadd.f32 %v462, %v465
    %vm467 = vweird.f32 %v461
    %vm468 = vweird.f32 %v462
    %vm469 = vmor %vm467, %vm468
    %v470 = vsel %vm469, %v462, %v466
    %v471 = vand.u32 2147483647, %v461
    %vm472 = vcmp.eq.f32.partialorder %v471, 8.507059e+37
    %v473 = vand.u32 %v461, 2147483648
    %v474 = vor.u32 1.1754944e-38, %v473
    %v475 = vsel %vm472, %v474, %v470
    %v476 = vmul.f32 1.0, %v475
    %477 = vst [vmem:[#allocation10] sm:$0xff] %v476
    // Predicated region
    $region54: #{tpu_custom_call.1} parent=1 // pred_check
      _
    $region55: #{tpu_custom_call.1} parent=1 // pred_check_branch
      %479 = sbr.rel (0) target = $region57
    $region56: #{tpu_custom_call.1} parent=1 // pred_region
      %481 = vsyncadd [#allocation4], 0
      %s483 = sshll.u32 [#allocation10], 4
      %s484 = int_to_ptr.vmem [resolvable:$true] %s483
      %s485 = sshll.u32 %s9, 4
      %s486 = int_to_ptr.hbm [resolvable:$true] %s485
      %488 = dma.vmem_to_hbm [thread:$0]  %s484, 128, %s486, [#allocation4]
    $region57: #{tpu_custom_call.1} parent=1 // pred_fallthru
      _
    // Predicated region
    $region58: #{tpu_custom_call.1} parent=1 // pred_check
      _
    $region59: #{tpu_custom_call.1} parent=1 // pred_check_branch
      %490 = sbr.rel (0) target = $region61
    $region60: #{tpu_custom_call.1} parent=1 // pred_region
      %492 = dma.done [#allocation4], 128
    $region61: #{tpu_custom_call.1} parent=1 // pred_fallthru
      _
    %493 = vsyncpa [#allocation3], 1
    %494 = vsyncpa [#allocation6], 1
    %495 = vsyncpa [#allocation9], 1
    %496 = vsyncpa [#allocation4], 1

</llo_original>
